<compile_context>
chip_gen: v5e
topology: v5e:2x2
jax: 0.10.0
libtpu: 0.0.40
codegen_flags: <defaults>
</compile_context>

<pallas_src>
import functools

import jax
import jax.numpy as jnp
from jax.experimental import pallas as pl
from jax.experimental.pallas import tpu as pltpu

LANE = 128


def _round_up(v, m):
    return (v + m - 1) // m * m


# ----------------------------- Pallas kernel -----------------------------

def psnn_kernel(x_ref, w_in_ref, b_in_ref, w_h_ref, b_h_ref, wp_ref, bp_ref,
                o_ref, *, n_layer, row_chunk):
    """One batch tile: x (tile, D_in) bf16 -> o (tile, n_out_pad) bf16.

    The layer stack runs over `row_chunk`-row sub-chunks of the tile so the
    f32 intermediates stay small (vreg/VMEM friendly) while the DMA block
    stays large.  All weights/biases are VMEM-resident (same block every
    grid step).  Matmuls use bf16 operands with f32 accumulation.
    """
    tile = x_ref.shape[0]
    cdt = w_in_ref.dtype  # bf16 MXU compute dtype

    # Hoist weight/bias loads out of the row-chunk loop.
    w_in = w_in_ref[...]
    b_in = b_in_ref[...]
    wp = wp_ref[...]
    bp = bp_ref[...]
    w_h = [w_h_ref[l] for l in range(n_layer)]
    b_h = [b_h_ref[l] for l in range(n_layer)]

    for start in range(0, tile, row_chunk):          # static unrolled chunks
        rows = min(row_chunk, tile - start)
        xc = x_ref[pl.ds(start, rows), :]             # already bf16

        # input layer + ReLU
        h = jnp.dot(xc, w_in, preferred_element_type=jnp.float32) + b_in
        h = jnp.maximum(h, 0.0)

        # hidden layers + ReLU (statically unrolled over stacked weights)
        for l in range(n_layer):
            h = jnp.dot(h.astype(cdt), w_h[l],
                        preferred_element_type=jnp.float32) + b_h[l]
            h = jnp.maximum(h, 0.0)

        # prediction head (no activation); 128-lane padded, bf16 writeback
        out = jnp.dot(h.astype(cdt), wp, preferred_element_type=jnp.float32) + bp
        o_ref[pl.ds(start, rows), :] = out.astype(o_ref.dtype)


# ------------------------------- wrapper ---------------------------------

def psnn_forward(x, params, *, batch_tile=2048, row_chunk=256,
                 min_pallas_batch=64, return_padded=False,
                 vmem_limit_bytes=None):
    """x: (B, input_dim*(n_visible+1)) float32.  params: prepare_params() output.

    Returns (B, n_output) float32 (or the padded (B_pad, 128) bf16 block when
    return_padded=True, to let downstream consumers avoid the slice re-read).
    """
    B, D_in = x.shape
    n_layer = params["w_h"].shape[0]
    n_hidden = params["w_in"].shape[1]
    n_out_pad = params["wp"].shape[1]          # 128-lane padded
    n_output = params["n_output"]
    cdt = params["w_in"].dtype                 # bf16

    # ---- tiny-batch fast path: pallas_call launch overhead dominates ----
    if B < min_pallas_batch:
        h = jnp.maximum(x @ params["w_in"].astype(jnp.float32)
                        + params["b_in"], 0.0)
        for l in range(n_layer):
            h = jnp.maximum(h @ params["w_h"][l].astype(jnp.float32)
                            + params["b_h"][l], 0.0)
        out = h @ params["wp"].astype(jnp.float32) + params["bp"]
        return out if return_padded else out[:, :n_output]

    # ---- tile / grid selection ----
    # Single step only for small batches; otherwise at least 2 grid steps so
    # both v7x TensorCores (batch axis is "parallel") get work, capped at
    # batch_tile rows per step to amortize per-step pipeline overhead.
    if B <= 256:
        num_steps = 1
    else:
        num_steps = max(2, pl.cdiv(B, batch_tile))
    tile = _round_up(pl.cdiv(B, num_steps), 16)   # sublane-friendly for bf16
    padded_B = tile * num_steps

    # Stream x as bf16 (halves the HBM read; MXU math is bf16 anyway).
    x = x.astype(cdt)
    if padded_B != B:
        x = jnp.pad(x, ((0, padded_B - B), (0, 0)))

    def resident(arr):
        nd = arr.ndim

        def imap(i):
            return (0,) * nd

        return pl.BlockSpec(arr.shape, imap)

    in_specs = [
        pl.BlockSpec((tile, D_in), lambda i: (i, 0)),     # x, tiled over batch
        resident(params["w_in"]), resident(params["b_in"]),
        resident(params["w_h"]), resident(params["b_h"]),
        resident(params["wp"]), resident(params["bp"]),
    ]
    out_spec = pl.BlockSpec((tile, n_out_pad), lambda i: (i, 0))

    # Advisory cost estimate so XLA can schedule around this small call.
    flops = 2 * padded_B * (D_in * n_hidden
                            + n_layer * n_hidden * n_hidden
                            + n_hidden * n_out_pad)
    weight_bytes = 0
    for k, v in params.items():
        if k == "n_output":
            continue
        weight_bytes += int(v.size) * v.dtype.itemsize
    bytes_accessed = padded_B * (D_in + n_out_pad) * 2 + weight_bytes
    cost = pl.CostEstimate(flops=flops, transcendentals=0,
                           bytes_accessed=bytes_accessed)

    # VMEM budget: double-buffered bf16 x (lane-padded to 128) + bf16 out.
    # Only raise the scoped limit when the estimate exceeds v5e's 16 MiB
    # default; cap at v7x's 64 MiB physical VMEM.
    if vmem_limit_bytes is None:
        per_row = 2 * 2 * (LANE + n_out_pad)       # bytes/row, double-buffered
        est = tile * per_row + (4 << 20)           # + weights/compiler scratch
        if est > (16 << 20):
            vmem_limit_bytes = min(est, 64 << 20)

    kernel = functools.partial(psnn_kernel, n_layer=n_layer,
                               row_chunk=min(row_chunk, tile))

    out_padded = pl.pallas_call(
        kernel,
        out_shape=jax.ShapeDtypeStruct((padded_B, n_out_pad), cdt),  # bf16
        grid_spec=pltpu.PrefetchScalarGridSpec(
            num_scalar_prefetch=0,
            grid=(num_steps,),
            in_specs=in_specs,
            out_specs=out_spec,
        ),
        compiler_params=pltpu.CompilerParams(
            dimension_semantics=("parallel",),     # shard batch across TCs
            vmem_limit_bytes=vmem_limit_bytes),
        cost_estimate=cost,
    )(x,
      params["w_in"], params["b_in"],
      params["w_h"], params["b_h"],
      params["wp"], params["bp"])

    if return_padded:
        return out_padded
    # NOTE: this slice is a separate XLA copy; pass return_padded=True if the
    # consumer can take the padded bf16 layout directly.
    return out_padded[:B, :n_output].astype(jnp.float32)


# -------------------- deterministic parameter init -----------------------

def init_psnn_params(key, input_dim=3, n_visible=3, n_hidden=64, n_output=3,
                     n_layer=3):
    """Mimics PyTorch nn.Linear default init: U(-1/sqrt(fan_in), 1/sqrt(fan_in)).
    Weights stored already transposed to (in, out); biases as (1, out)."""
    d_in = input_dim * (n_visible + 1)

    def linear(k, fan_in, fan_out):
        kw, kb = jax.random.split(k)
        bound = 1.0 / jnp.sqrt(fan_in)
        w = jax.random.uniform(kw, (fan_in, fan_out), jnp.float32, -bound, bound)
        b = jax.random.uniform(kb, (1, fan_out), jnp.float32, -bound, bound)
        return w, b

    keys = jax.random.split(key, n_layer + 2)
    w_in, b_in = linear(keys[0], d_in, n_hidden)
    hidden = [linear(keys[1 + l], n_hidden, n_hidden) for l in range(n_layer)]
    wp, bp = linear(keys[n_layer + 1], n_hidden, n_output)
    return {"w_in": w_in, "b_in": b_in, "hidden": hidden, "wp": wp, "bp": bp}


def prepare_params(raw, *, compute_dtype=jnp.bfloat16):
    """Stack hidden layers, zero-pad the head to 128 output lanes, cast
    weights to the MXU compute dtype (biases stay f32 on the f32-accumulate
    path).  The padded output lanes equal the zero-padded bias (0.0) — keep
    that invariant if weights are ever re-packed/quantized."""
    n_hidden = raw["w_in"].shape[1]
    n_output = raw["wp"].shape[1]
    n_out_pad = _round_up(n_output, LANE)

    wp_pad = jnp.zeros((n_hidden, n_out_pad), jnp.float32)
    wp_pad = wp_pad.at[:, :n_output].set(raw["wp"])
    bp_pad = jnp.zeros((1, n_out_pad), jnp.float32)
    bp_pad = bp_pad.at[:, :n_output].set(raw["bp"])

    w_h = jnp.stack([w for (w, _) in raw["hidden"]], axis=0)   # (L, H, H)
    b_h = jnp.stack([b for (_, b) in raw["hidden"]], axis=0)   # (L, 1, H)

    return {
        "w_in": raw["w_in"].astype(compute_dtype),
        "b_in": raw["b_in"].astype(jnp.float32),
        "w_h": w_h.astype(compute_dtype),
        "b_h": b_h.astype(jnp.float32),
        "wp": wp_pad.astype(compute_dtype),
        "bp": bp_pad,
        "n_output": n_output,
    }


def psnn_ref(x, raw):
    h = jnp.maximum(x @ raw["w_in"] + raw["b_in"], 0.0)
    for (w, b) in raw["hidden"]:
        h = jnp.maximum(h @ w + b, 0.0)
    return h @ raw["wp"] + raw["bp"]


# --------------------------------- main -----------------------------------

if __name__ == "__main__":
    key = jax.random.PRNGKey(0)
    k_param, k_x = jax.random.split(key)

    input_dim, n_visible, n_hidden, n_output, n_layer = 3, 3, 64, 3, 3
    d_in = input_dim * (n_visible + 1)   # 12

    raw_params = init_psnn_params(k_param, input_dim, n_visible, n_hidden,
                                  n_output, n_layer)
    kernel_params = prepare_params(raw_params, compute_dtype=jnp.bfloat16)

    # 8   -> tiny-batch jnp fast path
    # 200 -> Pallas, single grid step (ragged, padded to 208 rows)
    # 1000-> Pallas, 2 grid steps (both v7x TCs), ragged padding to 1024 rows
    for batch in (8, 200, 1000):
        xk = jax.random.fold_in(k_x, batch)
        x = jax.random.normal(xk, (batch, d_in), jnp.float32)

        out = jax.block_until_ready(psnn_forward(x, kernel_params))
        ref = psnn_ref(x, raw_params)

        assert out.shape == (batch, n_output)
        # bf16 input/operands/output with f32 accumulation -> loose tolerance;
        # not bit-comparable to the pure-f32 reference.
        max_err = float(jnp.max(jnp.abs(out - ref)))
        assert jnp.allclose(out, ref, atol=5e-2, rtol=5e-2), (
            f"batch={batch}: mismatch vs pure-JAX reference, "
            f"max abs err = {max_err}")

    print("KERNEL_OK")
</pallas_src>

<mosaic_0001>
module attributes {stable_mosaic.version = 11 : i64} {
  func.func @psnn_kernel(%arg0: i32, %arg1: memref<208x12xbf16, #tpu.memory_space<vmem>>, %arg2: memref<12x64xbf16, #tpu.memory_space<vmem>>, %arg3: memref<1x64xf32, #tpu.memory_space<vmem>>, %arg4: memref<3x64x64xbf16, #tpu.memory_space<vmem>>, %arg5: memref<3x1x64xf32, #tpu.memory_space<vmem>>, %arg6: memref<64x128xbf16, #tpu.memory_space<vmem>>, %arg7: memref<1x128xf32, #tpu.memory_space<vmem>>, %arg8: memref<208x128xbf16, #tpu.memory_space<vmem>>) attributes {dimension_semantics = [#tpu.dimension_semantics<parallel>], iteration_bounds = array<i64: 1>, scalar_prefetch = 0 : i64, scratch_operands = 0 : i64, tpu.core_type = #tpu.core_type<tc>, window_params = [{transform_indices = @transform_0, window_bounds = array<i64: 208, 12>}, {pipeline_mode = #tpu.pipeline_mode<synchronous>, transform_indices = @transform_1, window_bounds = array<i64: 12, 64>}, {pipeline_mode = #tpu.pipeline_mode<synchronous>, transform_indices = @transform_2, window_bounds = array<i64: 1, 64>}, {pipeline_mode = #tpu.pipeline_mode<synchronous>, transform_indices = @transform_3, window_bounds = array<i64: 3, 64, 64>}, {pipeline_mode = #tpu.pipeline_mode<synchronous>, transform_indices = @transform_4, window_bounds = array<i64: 3, 1, 64>}, {pipeline_mode = #tpu.pipeline_mode<synchronous>, transform_indices = @transform_5, window_bounds = array<i64: 64, 128>}, {pipeline_mode = #tpu.pipeline_mode<synchronous>, transform_indices = @transform_6, window_bounds = array<i64: 1, 128>}, {transform_indices = @transform_7, window_bounds = array<i64: 208, 128>}]} {
    %c0 = arith.constant 0 : index
    %c0_0 = arith.constant 0 : index
    %0 = vector.load %arg2[%c0, %c0_0] : memref<12x64xbf16, #tpu.memory_space<vmem>>, vector<12x64xbf16>
    %c0_1 = arith.constant 0 : index
    %c0_2 = arith.constant 0 : index
    %1 = vector.load %arg3[%c0_1, %c0_2] : memref<1x64xf32, #tpu.memory_space<vmem>>, vector<1x64xf32>
    %c0_3 = arith.constant 0 : index
    %c0_4 = arith.constant 0 : index
    %2 = vector.load %arg6[%c0_3, %c0_4] : memref<64x128xbf16, #tpu.memory_space<vmem>>, vector<64x128xbf16>
    %c0_5 = arith.constant 0 : index
    %c0_6 = arith.constant 0 : index
    %3 = vector.load %arg7[%c0_5, %c0_6] : memref<1x128xf32, #tpu.memory_space<vmem>>, vector<1x128xf32>
    %c0_7 = arith.constant 0 : index
    %c0_8 = arith.constant 0 : index
    %c0_9 = arith.constant 0 : index
    %4 = vector.load %arg4[%c0_7, %c0_8, %c0_9] : memref<3x64x64xbf16, #tpu.memory_space<vmem>>, vector<1x64x64xbf16>
    %5 = vector.shape_cast %4 : vector<1x64x64xbf16> to vector<64x64xbf16>
    %c1 = arith.constant 1 : index
    %c0_10 = arith.constant 0 : index
    %c0_11 = arith.constant 0 : index
    %6 = vector.load %arg4[%c1, %c0_10, %c0_11] : memref<3x64x64xbf16, #tpu.memory_space<vmem>>, vector<1x64x64xbf16>
    %7 = vector.shape_cast %6 : vector<1x64x64xbf16> to vector<64x64xbf16>
    %c2 = arith.constant 2 : index
    %c0_12 = arith.constant 0 : index
    %c0_13 = arith.constant 0 : index
    %8 = vector.load %arg4[%c2, %c0_12, %c0_13] : memref<3x64x64xbf16, #tpu.memory_space<vmem>>, vector<1x64x64xbf16>
    %9 = vector.shape_cast %8 : vector<1x64x64xbf16> to vector<64x64xbf16>
    %c0_14 = arith.constant 0 : index
    %c0_15 = arith.constant 0 : index
    %c0_16 = arith.constant 0 : index
    %10 = vector.load %arg5[%c0_14, %c0_15, %c0_16] : memref<3x1x64xf32, #tpu.memory_space<vmem>>, vector<1x1x64xf32>
    %11 = vector.shape_cast %10 : vector<1x1x64xf32> to vector<1x64xf32>
    %c1_17 = arith.constant 1 : index
    %c0_18 = arith.constant 0 : index
    %c0_19 = arith.constant 0 : index
    %12 = vector.load %arg5[%c1_17, %c0_18, %c0_19] : memref<3x1x64xf32, #tpu.memory_space<vmem>>, vector<1x1x64xf32>
    %13 = vector.shape_cast %12 : vector<1x1x64xf32> to vector<1x64xf32>
    %c2_20 = arith.constant 2 : index
    %c0_21 = arith.constant 0 : index
    %c0_22 = arith.constant 0 : index
    %14 = vector.load %arg5[%c2_20, %c0_21, %c0_22] : memref<3x1x64xf32, #tpu.memory_space<vmem>>, vector<1x1x64xf32>
    %15 = vector.shape_cast %14 : vector<1x1x64xf32> to vector<1x64xf32>
    %c0_23 = arith.constant 0 : index
    %c0_24 = arith.constant 0 : index
    %16 = vector.load %arg1[%c0_23, %c0_24] : memref<208x12xbf16, #tpu.memory_space<vmem>>, vector<208x12xbf16>
    %cst = arith.constant dense<0.000000e+00> : vector<208x64xf32>
    %17 = tpu.matmul %16, %0, %cst {dimension_numbers = #tpu.dot_dimension_numbers<[1], [0], [0], [1], [0, 0, 1, 1], [], []>} : vector<208x12xbf16>, vector<12x64xbf16>, vector<208x64xf32> -> vector<208x64xf32>
    %18 = vector.broadcast %1 : vector<1x64xf32> to vector<208x64xf32>
    %19 = arith.addf %17, %18 : vector<208x64xf32>
    %cst_25 = arith.constant 0.000000e+00 : f32
    %20 = vector.broadcast %cst_25 : f32 to vector<208x64xf32>
    %21 = arith.maximumf %19, %20 : vector<208x64xf32>
    %22 = arith.truncf %21 : vector<208x64xf32> to vector<208x64xbf16>
    %cst_26 = arith.constant dense<0.000000e+00> : vector<208x64xf32>
    %23 = tpu.matmul %22, %5, %cst_26 {dimension_numbers = #tpu.dot_dimension_numbers<[1], [0], [0], [1], [0, 0, 1, 1], [], []>} : vector<208x64xbf16>, vector<64x64xbf16>, vector<208x64xf32> -> vector<208x64xf32>
    %24 = vector.broadcast %11 : vector<1x64xf32> to vector<208x64xf32>
    %25 = arith.addf %23, %24 : vector<208x64xf32>
    %cst_27 = arith.constant 0.000000e+00 : f32
    %26 = vector.broadcast %cst_27 : f32 to vector<208x64xf32>
    %27 = arith.maximumf %25, %26 : vector<208x64xf32>
    %28 = arith.truncf %27 : vector<208x64xf32> to vector<208x64xbf16>
    %cst_28 = arith.constant dense<0.000000e+00> : vector<208x64xf32>
    %29 = tpu.matmul %28, %7, %cst_28 {dimension_numbers = #tpu.dot_dimension_numbers<[1], [0], [0], [1], [0, 0, 1, 1], [], []>} : vector<208x64xbf16>, vector<64x64xbf16>, vector<208x64xf32> -> vector<208x64xf32>
    %30 = vector.broadcast %13 : vector<1x64xf32> to vector<208x64xf32>
    %31 = arith.addf %29, %30 : vector<208x64xf32>
    %cst_29 = arith.constant 0.000000e+00 : f32
    %32 = vector.broadcast %cst_29 : f32 to vector<208x64xf32>
    %33 = arith.maximumf %31, %32 : vector<208x64xf32>
    %34 = arith.truncf %33 : vector<208x64xf32> to vector<208x64xbf16>
    %cst_30 = arith.constant dense<0.000000e+00> : vector<208x64xf32>
    %35 = tpu.matmul %34, %9, %cst_30 {dimension_numbers = #tpu.dot_dimension_numbers<[1], [0], [0], [1], [0, 0, 1, 1], [], []>} : vector<208x64xbf16>, vector<64x64xbf16>, vector<208x64xf32> -> vector<208x64xf32>
    %36 = vector.broadcast %15 : vector<1x64xf32> to vector<208x64xf32>
    %37 = arith.addf %35, %36 : vector<208x64xf32>
    %cst_31 = arith.constant 0.000000e+00 : f32
    %38 = vector.broadcast %cst_31 : f32 to vector<208x64xf32>
    %39 = arith.maximumf %37, %38 : vector<208x64xf32>
    %40 = arith.truncf %39 : vector<208x64xf32> to vector<208x64xbf16>
    %cst_32 = arith.constant dense<0.000000e+00> : vector<208x128xf32>
    %41 = tpu.matmul %40, %2, %cst_32 {dimension_numbers = #tpu.dot_dimension_numbers<[1], [0], [0], [1], [0, 0, 1, 1], [], []>} : vector<208x64xbf16>, vector<64x128xbf16>, vector<208x128xf32> -> vector<208x128xf32>
    %42 = vector.broadcast %3 : vector<1x128xf32> to vector<208x128xf32>
    %43 = arith.addf %41, %42 : vector<208x128xf32>
    %44 = arith.truncf %43 : vector<208x128xf32> to vector<208x128xbf16>
    %c0_33 = arith.constant 0 : index
    %c0_34 = arith.constant 0 : index
    %45 = vector.load %arg8[%c0_33, %c0_34] : memref<208x128xbf16, #tpu.memory_space<vmem>>, vector<208x128xbf16>
    tpu.vector_store %arg8[%c0_33, %c0_34], %44 {strides = array<i32>} : memref<208x128xbf16, #tpu.memory_space<vmem>>, vector<208x128xbf16>,
    return
  }
  func.func @transform_0(%arg0: i32) -> (i32, i32) {
    %c0_i32 = arith.constant 0 : i32
    %c0_i32_0 = arith.constant 0 : i32
    return %arg0, %c0_i32 : i32, i32
  }
  func.func @transform_1(%arg0: i32) -> (i32, i32) {
    %c0_i32 = arith.constant 0 : i32
    %c0_i32_0 = arith.constant 0 : i32
    %c0_i32_1 = arith.constant 0 : i32
    return %c0_i32, %c0_i32_0 : i32, i32
  }
  func.func @transform_2(%arg0: i32) -> (i32, i32) {
    %c0_i32 = arith.constant 0 : i32
    %c0_i32_0 = arith.constant 0 : i32
    %c0_i32_1 = arith.constant 0 : i32
    return %c0_i32, %c0_i32_0 : i32, i32
  }
  func.func @transform_3(%arg0: i32) -> (i32, i32, i32) {
    %c0_i32 = arith.constant 0 : i32
    %c0_i32_0 = arith.constant 0 : i32
    %c0_i32_1 = arith.constant 0 : i32
    %c0_i32_2 = arith.constant 0 : i32
    return %c0_i32, %c0_i32_0, %c0_i32_1 : i32, i32, i32
  }
  func.func @transform_4(%arg0: i32) -> (i32, i32, i32) {
    %c0_i32 = arith.constant 0 : i32
    %c0_i32_0 = arith.constant 0 : i32
    %c0_i32_1 = arith.constant 0 : i32
    %c0_i32_2 = arith.constant 0 : i32
    return %c0_i32, %c0_i32_0, %c0_i32_1 : i32, i32, i32
  }
  func.func @transform_5(%arg0: i32) -> (i32, i32) {
    %c0_i32 = arith.constant 0 : i32
    %c0_i32_0 = arith.constant 0 : i32
    %c0_i32_1 = arith.constant 0 : i32
    return %c0_i32, %c0_i32_0 : i32, i32
  }
  func.func @transform_6(%arg0: i32) -> (i32, i32) {
    %c0_i32 = arith.constant 0 : i32
    %c0_i32_0 = arith.constant 0 : i32
    %c0_i32_1 = arith.constant 0 : i32
    return %c0_i32, %c0_i32_0 : i32, i32
  }
  func.func @transform_7(%arg0: i32) -> (i32, i32) {
    %c0_i32 = arith.constant 0 : i32
    %c0_i32_0 = arith.constant 0 : i32
    return %arg0, %c0_i32 : i32, i32
  }
}

</mosaic_0001>

<llo_original>
// kernel: tpu_custom_call.1
$region0: #{tpu_custom_call.1}
  #allocation0 [shape = 'u32[]', space=smem, size = 0x4, offset = 0x4, fixed_abs, tag = 'smem constant byte address 0x4 - core index']
  #allocation1 [shape = 'u32[72,128]{1,0:T(1,128)}', space=vmem, size = 0x9000, scoped, tag = 'internal scratch']
  %s0 = inlined_call_operand.vmem [shape: bf16[208,12], index: 0, kind: input, shape index: {}]
  %s1 = inlined_call_operand.vmem [shape: bf16[12,64], index: 1, kind: input, shape index: {}]
  %s2 = inlined_call_operand.vmem [shape: f32[1,64], index: 2, kind: input, shape index: {}]
  %s3 = inlined_call_operand.vmem [shape: bf16[3,64,64], index: 3, kind: input, shape index: {}]
  %s4 = inlined_call_operand.vmem [shape: f32[3,1,64], index: 4, kind: input, shape index: {}]
  %s5 = inlined_call_operand.hbm [shape: bf16[64,128], index: 5, kind: input, shape index: {}]
  %s6 = inlined_call_operand.vmem [shape: f32[1,128], index: 6, kind: input, shape index: {}]
  %s7 = inlined_call_operand.hbm [shape: bf16[208,128], index: 7, kind: output, shape index: {}]
  %s8 = sld [smem:[#allocation0]]
  $region42: #{tpu_custom_call.1} parent=0
    _
  %s10 = ssub.s32 1, %s8
  %s11 = scalar_select 0, %s10, %s8
  $region1: #{tpu_custom_call.1} parent=0
    #allocation2 [shape = 'u8[16384]{0}', space=vmem, size = 0x4000, scoped, tag = 'input window, operand 5, single buffered']
    #allocation3 [shape = 's32[1]{0}', space=sflag, size = 0x4, scoped, tag = 'scoped memory for tpu_custom_call.1']
    #allocation4 [shape = 's32[1]{0}', space=sflag, size = 0x4, scoped, tag = 'scoped memory for tpu_custom_call.1']
    #allocation5 [shape = 'u8[53248]{0}', space=vmem, size = 0xd000, scoped, tag = 'output window, operand 0, single buffered']
    %12 = vsyncpa [#allocation3], 0
    %13 = vsyncpa [#allocation4], 0
    // Predicated region
    $region2: #{tpu_custom_call.1} parent=1 // pred_check
      _
    $region3: #{tpu_custom_call.1} parent=1 // pred_check_branch
      %15 = sbr.rel (0) target = $region5
    $region4: #{tpu_custom_call.1} parent=1 // pred_region
      _
    $region5: #{tpu_custom_call.1} parent=1 // pred_fallthru
      _
    // Predicated region
    $region6: #{tpu_custom_call.1} parent=1 // pred_check
      _
    $region7: #{tpu_custom_call.1} parent=1 // pred_check_branch
      %17 = sbr.rel (0) target = $region9
    $region8: #{tpu_custom_call.1} parent=1 // pred_region
      _
    $region9: #{tpu_custom_call.1} parent=1 // pred_fallthru
      _
    // Predicated region
    $region10: #{tpu_custom_call.1} parent=1 // pred_check
      _
    $region11: #{tpu_custom_call.1} parent=1 // pred_check_branch
      %19 = sbr.rel (0) target = $region13
    $region12: #{tpu_custom_call.1} parent=1 // pred_region
      _
    $region13: #{tpu_custom_call.1} parent=1 // pred_fallthru
      _
    // Predicated region
    $region14: #{tpu_custom_call.1} parent=1 // pred_check
      _
    $region15: #{tpu_custom_call.1} parent=1 // pred_check_branch
      %21 = sbr.rel (0) target = $region17
    $region16: #{tpu_custom_call.1} parent=1 // pred_region
      _
    $region17: #{tpu_custom_call.1} parent=1 // pred_fallthru
      _
    // Predicated region
    $region18: #{tpu_custom_call.1} parent=1 // pred_check
      _
    $region19: #{tpu_custom_call.1} parent=1 // pred_check_branch
      %23 = sbr.rel (0) target = $region21
    $region20: #{tpu_custom_call.1} parent=1 // pred_region
      _
    $region21: #{tpu_custom_call.1} parent=1 // pred_fallthru
      _
    // Predicated region
    $region22: #{tpu_custom_call.1} parent=1 // pred_check
      _
    $region23: #{tpu_custom_call.1} parent=1 // pred_check_branch
      %25 = sbr.rel (0) target = $region25
    $region24: #{tpu_custom_call.1} parent=1 // pred_region
      %27 = vsyncadd [#allocation3], 0
      %s28 = sshll.u32 %s5, 4
      %s29 = int_to_ptr.hbm [resolvable:$true] %s28
      %s30 = sshll.u32 [#allocation2], 4
      %s31 = int_to_ptr.vmem [resolvable:$true] %s30
      %36 = dma.hbm_to_vmem [thread:$0]  %s29, 512, %s31, [#allocation3], 64, 64, 4
    $region25: #{tpu_custom_call.1} parent=1 // pred_fallthru
      _
    // Predicated region
    $region26: #{tpu_custom_call.1} parent=1 // pred_check
      _
    $region27: #{tpu_custom_call.1} parent=1 // pred_check_branch
      %38 = sbr.rel (0) target = $region29
    $region28: #{tpu_custom_call.1} parent=1 // pred_region
      _
    $region29: #{tpu_custom_call.1} parent=1 // pred_fallthru
      _
    // Predicated region
    $region30: #{tpu_custom_call.1} parent=1 // pred_check
      _
    $region31: #{tpu_custom_call.1} parent=1 // pred_check_branch
      %40 = sbr.rel (0) target = $region33
    $region32: #{tpu_custom_call.1} parent=1 // pred_region
      %42 = dma.done [#allocation3], 512
    $region33: #{tpu_custom_call.1} parent=1 // pred_fallthru
      _
    %v44 = vld [vmem:[%s1] sm:$0xf]
    %v45 = vld [vmem:[%s1 + $0x4] sm:$0x3]
    %v46 = vld [vmem:[%s2] sm:$0x1]
    %v47 = vld [vmem:[#allocation2] sm:$0xf]
    %v48 = vld [vmem:[#allocation2 + $0x4] sm:$0xf]
    %v49 = vld [vmem:[#allocation2 + $0x8] sm:$0xf]
    %v50 = vld [vmem:[#allocation2 + $0xc] sm:$0xf]
    %v51 = vld [vmem:[#allocation2 + $0x10] sm:$0xf]
    %v52 = vld [vmem:[#allocation2 + $0x14] sm:$0xf]
    %v53 = vld [vmem:[#allocation2 + $0x18] sm:$0xf]
    %v54 = vld [vmem:[#allocation2 + $0x1c] sm:$0xf]
    %v55 = vld [vmem:[%s6] sm:$0x1]
    %v56 = vld [vmem:[%s3] sm:$0xf]
    %v57 = vld [vmem:[%s3 + $0x4] sm:$0xf]
    %v58 = vld [vmem:[%s3 + $0x8] sm:$0xf]
    %v59 = vld [vmem:[%s3 + $0xc] sm:$0xf]
    %v60 = vld [vmem:[%s3 + $0x10] sm:$0xf]
    %v61 = vld [vmem:[%s3 + $0x14] sm:$0xf]
    %v62 = vld [vmem:[%s3 + $0x18] sm:$0xf]
    %v63 = vld [vmem:[%s3 + $0x1c] sm:$0xf]
    %s64 = scalar_lea.vmem %s3, 32
    %v65 = vld [vmem:[%s64] sm:$0xf]
    %v66 = vld [vmem:[%s64 + $0x4] sm:$0xf]
    %v67 = vld [vmem:[%s64 + $0x8] sm:$0xf]
    %v68 = vld [vmem:[%s64 + $0xc] sm:$0xf]
    %v69 = vld [vmem:[%s64 + $0x10] sm:$0xf]
    %v70 = vld [vmem:[%s64 + $0x14] sm:$0xf]
    %v71 = vld [vmem:[%s64 + $0x18] sm:$0xf]
    %v72 = vld [vmem:[%s64 + $0x1c] sm:$0xf]
    %s73 = scalar_lea.vmem %s3, 64
    %v74 = vld [vmem:[%s73] sm:$0xf]
    %v75 = vld [vmem:[%s73 + $0x4] sm:$0xf]
    %v76 = vld [vmem:[%s73 + $0x8] sm:$0xf]
    %v77 = vld [vmem:[%s73 + $0xc] sm:$0xf]
    %v78 = vld [vmem:[%s73 + $0x10] sm:$0xf]
    %v79 = vld [vmem:[%s73 + $0x14] sm:$0xf]
    %v80 = vld [vmem:[%s73 + $0x18] sm:$0xf]
    %v81 = vld [vmem:[%s73 + $0x1c] sm:$0xf]
    %v82 = vld [vmem:[%s4] sm:$0x1]
    %s83 = scalar_lea.vmem %s4, 1
    %v84 = vld [vmem:[%s83] sm:$0x1]
    %s85 = scalar_lea.vmem %s4, 2
    %v86 = vld [vmem:[%s85] sm:$0x1]
    %v87 = vld [vmem:[%s0] sm:$0xf]
    %v88 = vld [vmem:[%s0 + $0x4] sm:$0xf]
    %v89 = vld [vmem:[%s0 + $0x8] sm:$0xf]
    %v90 = vld [vmem:[%s0 + $0xc] sm:$0xf]
    %v91 = vld [vmem:[%s0 + $0x10] sm:$0xf]
    %v92 = vld [vmem:[%s0 + $0x14] sm:$0xf]
    %v93 = vld [vmem:[%s0 + $0x18] sm:$0xf]
    %v94 = vld [vmem:[%s0 + $0x1c] sm:$0xf]
    %v95 = vld [vmem:[%s0 + $0x20] sm:$0xf]
    %v96 = vld [vmem:[%s0 + $0x24] sm:$0xf]
    %v97 = vld [vmem:[%s0 + $0x28] sm:$0xf]
    %v98 = vld [vmem:[%s0 + $0x2c] sm:$0xf]
    %v99 = vld [vmem:[%s0 + $0x30] sm:$0xf]
    %v100 = vld [vmem:[%s0 + $0x34] sm:$0xf]
    %v101 = vld [vmem:[%s0 + $0x38] sm:$0xf]
    %v102 = vld [vmem:[%s0 + $0x3c] sm:$0xf]
    %v103 = vld [vmem:[%s0 + $0x40] sm:$0xf]
    %v104 = vld [vmem:[%s0 + $0x44] sm:$0xf]
    %v105 = vld [vmem:[%s0 + $0x48] sm:$0xf]
    %v106 = vld [vmem:[%s0 + $0x4c] sm:$0xf]
    %v107 = vld [vmem:[%s0 + $0x50] sm:$0xf]
    %v108 = vld [vmem:[%s0 + $0x54] sm:$0xf]
    %v109 = vld [vmem:[%s0 + $0x58] sm:$0xf]
    %v110 = vld [vmem:[%s0 + $0x5c] sm:$0xf]
    %v111 = vld [vmem:[%s0 + $0x60] sm:$0xf]
    %v112 = vld [vmem:[%s0 + $0x64] sm:$0xf]
    %v114 = vperm.slane %v46, 0
    %v142 = vunpack.c.l.b16 %v87
    %v143 = vunpack.c.l.b16 %v88
    %v144 = vunpack.c.l.b16 %v89
    %v145 = vunpack.c.l.b16 %v90
    %v146 = vunpack.c.l.b16 %v91
    %v147 = vunpack.c.l.b16 %v92
    %v148 = vunpack.c.l.b16 %v93
    %v149 = vunpack.c.l.b16 %v94
    %v150 = vunpack.c.l.b16 %v95
    %v151 = vunpack.c.l.b16 %v96
    %v152 = vunpack.c.l.b16 %v97
    %v153 = vunpack.c.l.b16 %v98
    %v154 = vunpack.c.l.b16 %v99
    %v155 = vunpack.c.l.b16 %v100
    %v156 = vunpack.c.l.b16 %v101
    %v157 = vunpack.c.l.b16 %v102
    %v158 = vunpack.c.l.b16 %v103
    %v159 = vunpack.c.l.b16 %v104
    %v160 = vunpack.c.l.b16 %v105
    %v161 = vunpack.c.l.b16 %v106
    %v162 = vunpack.c.l.b16 %v107
    %v163 = vunpack.c.l.b16 %v108
    %v164 = vunpack.c.l.b16 %v109
    %v165 = vunpack.c.l.b16 %v110
    %v166 = vunpack.c.l.b16 %v111
    %v167 = vunpack.c.l.b16 %v112
    %v168 = vpack.c.b16 %v143, %v142
    %v169 = vpack.c.b16 %v145, %v144
    %v170 = vpack.c.b16 %v147, %v146
    %v171 = vpack.c.b16 %v149, %v148
    %v172 = vpack.c.b16 %v151, %v150
    %v173 = vpack.c.b16 %v153, %v152
    %v174 = vpack.c.b16 %v155, %v154
    %v175 = vpack.c.b16 %v157, %v156
    %v176 = vpack.c.b16 %v159, %v158
    %v177 = vpack.c.b16 %v161, %v160
    %v178 = vpack.c.b16 %v163, %v162
    %v179 = vpack.c.b16 %v165, %v164
    %v180 = vpack.c.b16 %v167, %v166
    %v183 = vunpack.c.l.b16 %v44
    %v184 = vunpack.c.l.b16 %v45
    %v185 = vpack.c.b16 %v184, %v183
    %vm186 = vcmask 97280
    %v188 = vsel %vm186, %v168, 0
    %v191 = vsel %vm186, %v169, 0
    %v194 = vsel %vm186, %v170, 0
    %v197 = vsel %vm186, %v171, 0
    %v200 = vsel %vm186, %v172, 0
    %v203 = vsel %vm186, %v173, 0
    %v206 = vsel %vm186, %v174, 0
    %v209 = vsel %vm186, %v175, 0
    %v212 = vsel %vm186, %v176, 0
    %v215 = vsel %vm186, %v177, 0
    %v218 = vsel %vm186, %v178, 0
    %v221 = vsel %vm186, %v179, 0
    %v224 = vsel %vm186, %v180, 0
    %vm226 = vcmask 1045504
    %v228 = vsel %vm226, %v185, 0
    %230 = vmatpush.bf16.msra.mxu0 0
    %231 = vmatpush.bf16.msra.mxu0 0
    %232 = vmatpush.bf16.msra.mxu0 0
    %233 = vmatpush.bf16.msra.mxu0 0
    %234 = vmatpush.bf16.msra.mxu0 0
    %235 = vmatpush.bf16.msra.mxu0 0
    %236 = vmatpush.bf16.msra.mxu0 0
    %237 = vmatpush.bf16.msra.mxu0 %v228
    %238 = vmatmul.bf16.gmra.mxu0 %v188
    %v239 = vpop.f32.mrf.mxu0
    %v240 = vadd.f32 %v114, %v239
    %v241 = vpop.f32.mrf.mxu0
    %v242 = vadd.f32 %v114, %v241
    %243 = vmatmul.bf16.gmra.mxu0 %v191
    %v244 = vpop.f32.mrf.mxu0
    %v245 = vadd.f32 %v114, %v244
    %v246 = vpop.f32.mrf.mxu0
    %v247 = vadd.f32 %v114, %v246
    %248 = vmatmul.bf16.gmra.mxu0 %v194
    %v249 = vpop.f32.mrf.mxu0
    %v250 = vadd.f32 %v114, %v249
    %v251 = vpop.f32.mrf.mxu0
    %v252 = vadd.f32 %v114, %v251
    %253 = vmatmul.bf16.gmra.mxu0 %v197
    %v254 = vpop.f32.mrf.mxu0
    %v255 = vadd.f32 %v114, %v254
    %v256 = vpop.f32.mrf.mxu0
    %v257 = vadd.f32 %v114, %v256
    %258 = vmatmul.bf16.gmra.mxu0 %v200
    %v259 = vpop.f32.mrf.mxu0
    %v260 = vadd.f32 %v114, %v259
    %v261 = vpop.f32.mrf.mxu0
    %v262 = vadd.f32 %v114, %v261
    %263 = vmatmul.bf16.gmra.mxu0 %v203
    %v264 = vpop.f32.mrf.mxu0
    %v265 = vadd.f32 %v114, %v264
    %v266 = vpop.f32.mrf.mxu0
    %v267 = vadd.f32 %v114, %v266
    %268 = vmatmul.bf16.gmra.mxu0 %v206
    %v269 = vpop.f32.mrf.mxu0
    %v270 = vadd.f32 %v114, %v269
    %v271 = vpop.f32.mrf.mxu0
    %v272 = vadd.f32 %v114, %v271
    %273 = vmatmul.bf16.gmra.mxu0 %v209
    %v274 = vpop.f32.mrf.mxu0
    %v275 = vadd.f32 %v114, %v274
    %v276 = vpop.f32.mrf.mxu0
    %v277 = vadd.f32 %v114, %v276
    %278 = vmatmul.bf16.gmra.mxu0 %v212
    %v279 = vpop.f32.mrf.mxu0
    %v280 = vadd.f32 %v114, %v279
    %v281 = vpop.f32.mrf.mxu0
    %v282 = vadd.f32 %v114, %v281
    %283 = vmatmul.bf16.gmra.mxu0 %v215
    %v284 = vpop.f32.mrf.mxu0
    %v285 = vadd.f32 %v114, %v284
    %v286 = vpop.f32.mrf.mxu0
    %v287 = vadd.f32 %v114, %v286
    %288 = vmatmul.bf16.gmra.mxu0 %v218
    %v289 = vpop.f32.mrf.mxu0
    %v290 = vadd.f32 %v114, %v289
    %v291 = vpop.f32.mrf.mxu0
    %v292 = vadd.f32 %v114, %v291
    %293 = vmatmul.bf16.gmra.mxu0 %v221
    %v294 = vpop.f32.mrf.mxu0
    %v295 = vadd.f32 %v114, %v294
    %v296 = vpop.f32.mrf.mxu0
    %v297 = vadd.f32 %v114, %v296
    %298 = vmatmul.bf16.gmra.mxu0 %v224
    %v299 = vpop.f32.mrf.mxu0
    %v300 = vadd.f32 %v114, %v299
    %v301 = vpop.f32.mrf.mxu0
    %v302 = vadd.f32 %v114, %v301
    %303 = vdwg.mxu0
    %v304 = vmax.f32 %v240, 0.0
    %v305 = vmax.f32 %v242, 0.0
    %v306 = vmax.f32 %v245, 0.0
    %v307 = vmax.f32 %v247, 0.0
    %v308 = vmax.f32 %v250, 0.0
    %v309 = vmax.f32 %v252, 0.0
    %v310 = vmax.f32 %v255, 0.0
    %v311 = vmax.f32 %v257, 0.0
    %v312 = vmax.f32 %v260, 0.0
    %v313 = vmax.f32 %v262, 0.0
    %v314 = vmax.f32 %v265, 0.0
    %v315 = vmax.f32 %v267, 0.0
    %v316 = vmax.f32 %v270, 0.0
    %v317 = vmax.f32 %v272, 0.0
    %v318 = vmax.f32 %v275, 0.0
    %v319 = vmax.f32 %v277, 0.0
    %v320 = vmax.f32 %v280, 0.0
    %v321 = vmax.f32 %v282, 0.0
    %v322 = vmax.f32 %v285, 0.0
    %v323 = vmax.f32 %v287, 0.0
    %v324 = vmax.f32 %v290, 0.0
    %v325 = vmax.f32 %v292, 0.0
    %v326 = vmax.f32 %v295, 0.0
    %v327 = vmax.f32 %v297, 0.0
    %v328 = vmax.f32 %v300, 0.0
    %v329 = vmax.f32 %v302, 0.0
    %v330 = vpack.c.bf16 %v305, %v304
    %v331 = vpack.c.bf16 %v307, %v306
    %v332 = vpack.c.bf16 %v309, %v308
    %v333 = vpack.c.bf16 %v311, %v310
    %v334 = vpack.c.bf16 %v313, %v312
    %v335 = vpack.c.bf16 %v315, %v314
    %v336 = vpack.c.bf16 %v317, %v316
    %v337 = vpack.c.bf16 %v319, %v318
    %v338 = vpack.c.bf16 %v321, %v320
    %v339 = vpack.c.bf16 %v323, %v322
    %v340 = vpack.c.bf16 %v325, %v324
    %v341 = vpack.c.bf16 %v327, %v326
    %v342 = vpack.c.bf16 %v329, %v328
    %v344 = vperm.slane %v82, 0
    %v354 = vunpack.c.l.b16 %v56
    %v355 = vunpack.c.l.b16 %v57
    %v356 = vunpack.c.l.b16 %v58
    %v357 = vunpack.c.l.b16 %v59
    %v358 = vunpack.c.l.b16 %v60
    %v359 = vunpack.c.l.b16 %v61
    %v360 = vunpack.c.l.b16 %v62
    %v361 = vunpack.c.l.b16 %v63
    %v362 = vpack.c.b16 %v355, %v354
    %v363 = vpack.c.b16 %v357, %v356
    %v364 = vpack.c.b16 %v359, %v358
    %v365 = vpack.c.b16 %v361, %v360
    %vm370 = vcmask 523264
    %v372 = vsel %vm370, %v330, 0
    %v375 = vsel %vm370, %v331, 0
    %v378 = vsel %vm370, %v332, 0
    %v381 = vsel %vm370, %v333, 0
    %v384 = vsel %vm370, %v334, 0
    %v387 = vsel %vm370, %v335, 0
    %v390 = vsel %vm370, %v336, 0
    %v393 = vsel %vm370, %v337, 0
    %v396 = vsel %vm370, %v338, 0
    %v399 = vsel %vm370, %v339, 0
    %v402 = vsel %vm370, %v340, 0
    %v405 = vsel %vm370, %v341, 0
    %v408 = vsel %vm370, %v342, 0
    %410 = vmatpush.bf16.msra.mxu0 0
    %411 = vmatpush.bf16.msra.mxu0 0
    %412 = vmatpush.bf16.msra.mxu0 0
    %413 = vmatpush.bf16.msra.mxu0 0
    %414 = vmatpush.bf16.msra.mxu0 %v365
    %415 = vmatpush.bf16.msra.mxu0 %v364
    %416 = vmatpush.bf16.msra.mxu0 %v363
    %417 = vmatpush.bf16.msra.mxu0 %v362
    %418 = vmatmul.bf16.gmra.mxu0 %v372
    %v419 = vpop.f32.mrf.mxu0
    %v420 = vadd.f32 %v344, %v419
    %v421 = vpop.f32.mrf.mxu0
    %v422 = vadd.f32 %v344, %v421
    %423 = vmatmul.bf16.gmra.mxu0 %v375
    %v424 = vpop.f32.mrf.mxu0
    %v425 = vadd.f32 %v344, %v424
    %v426 = vpop.f32.mrf.mxu0
    %v427 = vadd.f32 %v344, %v426
    %428 = vmatmul.bf16.gmra.mxu0 %v378
    %v429 = vpop.f32.mrf.mxu0
    %v430 = vadd.f32 %v344, %v429
    %v431 = vpop.f32.mrf.mxu0
    %v432 = vadd.f32 %v344, %v431
    %433 = vmatmul.bf16.gmra.mxu0 %v381
    %v434 = vpop.f32.mrf.mxu0
    %v435 = vadd.f32 %v344, %v434
    %v436 = vpop.f32.mrf.mxu0
    %v437 = vadd.f32 %v344, %v436
    %438 = vmatmul.bf16.gmra.mxu0 %v384
    %v439 = vpop.f32.mrf.mxu0
    %v440 = vadd.f32 %v344, %v439
    %v441 = vpop.f32.mrf.mxu0
    %v442 = vadd.f32 %v344, %v441
    %443 = vmatmul.bf16.gmra.mxu0 %v387
    %v444 = vpop.f32.mrf.mxu0
    %v445 = vadd.f32 %v344, %v444
    %v446 = vpop.f32.mrf.mxu0
    %v447 = vadd.f32 %v344, %v446
    %448 = vmatmul.bf16.gmra.mxu0 %v390
    %v449 = vpop.f32.mrf.mxu0
    %v450 = vadd.f32 %v344, %v449
    %v451 = vpop.f32.mrf.mxu0
    %v452 = vadd.f32 %v344, %v451
    %453 = vmatmul.bf16.gmra.mxu0 %v393
    %v454 = vpop.f32.mrf.mxu0
    %v455 = vadd.f32 %v344, %v454
    %v456 = vpop.f32.mrf.mxu0
    %v457 = vadd.f32 %v344, %v456
    %458 = vmatmul.bf16.gmra.mxu0 %v396
    %v459 = vpop.f32.mrf.mxu0
    %v460 = vadd.f32 %v344, %v459
    %v461 = vpop.f32.mrf.mxu0
    %v462 = vadd.f32 %v344, %v461
    %463 = vmatmul.bf16.gmra.mxu0 %v399
    %v464 = vpop.f32.mrf.mxu0
    %v465 = vadd.f32 %v344, %v464
    %v466 = vpop.f32.mrf.mxu0
    %v467 = vadd.f32 %v344, %v466
    %468 = vmatmul.bf16.gmra.mxu0 %v402
    %v469 = vpop.f32.mrf.mxu0
    %v470 = vadd.f32 %v344, %v469
    %v471 = vpop.f32.mrf.mxu0
    %v472 = vadd.f32 %v344, %v471
    %473 = vmatmul.bf16.gmra.mxu0 %v405
    %v474 = vpop.f32.mrf.mxu0
    %v475 = vadd.f32 %v344, %v474
    %v476 = vpop.f32.mrf.mxu0
    %v477 = vadd.f32 %v344, %v476
    %478 = vmatmul.bf16.gmra.mxu0 %v408
    %v479 = vpop.f32.mrf.mxu0
    %v480 = vadd.f32 %v344, %v479
    %v481 = vpop.f32.mrf.mxu0
    %v482 = vadd.f32 %v344, %v481
    %483 = vdwg.mxu0
    %v484 = vmax.f32 %v420, 0.0
    %v485 = vmax.f32 %v422, 0.0
    %v486 = vmax.f32 %v425, 0.0
    %v487 = vmax.f32 %v427, 0.0
    %v488 = vmax.f32 %v430, 0.0
    %v489 = vmax.f32 %v432, 0.0
    %v490 = vmax.f32 %v435, 0.0
    %v491 = vmax.f32 %v437, 0.0
    %v492 = vmax.f32 %v440, 0.0
    %v493 = vmax.f32 %v442, 0.0
    %v494 = vmax.f32 %v445, 0.0
    %v495 = vmax.f32 %v447, 0.0
    %v496 = vmax.f32 %v450, 0.0
    %v497 = vmax.f32 %v452, 0.0
    %v498 = vmax.f32 %v455, 0.0
    %v499 = vmax.f32 %v457, 0.0
    %v500 = vmax.f32 %v460, 0.0
    %v501 = vmax.f32 %v462, 0.0
    %v502 = vmax.f32 %v465, 0.0
    %v503 = vmax.f32 %v467, 0.0
    %v504 = vmax.f32 %v470, 0.0
    %v505 = vmax.f32 %v472, 0.0
    %v506 = vmax.f32 %v475, 0.0
    %v507 = vmax.f32 %v477, 0.0
    %v508 = vmax.f32 %v480, 0.0
    %v509 = vmax.f32 %v482, 0.0
    %v510 = vpack.c.bf16 %v485, %v484
    %v511 = vpack.c.bf16 %v487, %v486
    %v512 = vpack.c.bf16 %v489, %v488
    %v513 = vpack.c.bf16 %v491, %v490
    %v514 = vpack.c.bf16 %v493, %v492
    %v515 = vpack.c.bf16 %v495, %v494
    %v516 = vpack.c.bf16 %v497, %v496
    %v517 = vpack.c.bf16 %v499, %v498
    %v518 = vpack.c.bf16 %v501, %v500
    %v519 = vpack.c.bf16 %v503, %v502
    %v520 = vpack.c.bf16 %v505, %v504
    %v521 = vpack.c.bf16 %v507, %v506
    %v522 = vpack.c.bf16 %v509, %v508
    %v524 = vperm.slane %v84, 0
    %v534 = vunpack.c.l.b16 %v65
    %v535 = vunpack.c.l.b16 %v66
    %v536 = vunpack.c.l.b16 %v67
    %v537 = vunpack.c.l.b16 %v68
    %v538 = vunpack.c.l.b16 %v69
    %v539 = vunpack.c.l.b16 %v70
    %v540 = vunpack.c.l.b16 %v71
    %v541 = vunpack.c.l.b16 %v72
    %v542 = vpack.c.b16 %v535, %v534
    %v543 = vpack.c.b16 %v537, %v536
    %v544 = vpack.c.b16 %v539, %v538
    %v545 = vpack.c.b16 %v541, %v540
    %v551 = vsel %vm370, %v510, 0
    %v554 = vsel %vm370, %v511, 0
    %v557 = vsel %vm370, %v512, 0
    %v560 = vsel %vm370, %v513, 0
    %v563 = vsel %vm370, %v514, 0
    %v566 = vsel %vm370, %v515, 0
    %v569 = vsel %vm370, %v516, 0
    %v572 = vsel %vm370, %v517, 0
    %v575 = vsel %vm370, %v518, 0
    %v578 = vsel %vm370, %v519, 0
    %v581 = vsel %vm370, %v520, 0
    %v584 = vsel %vm370, %v521, 0
    %v587 = vsel %vm370, %v522, 0
    %589 = vmatpush.bf16.msra.mxu0 0
    %590 = vmatpush.bf16.msra.mxu0 0
    %591 = vmatpush.bf16.msra.mxu0 0
    %592 = vmatpush.bf16.msra.mxu0 0
    %593 = vmatpush.bf16.msra.mxu0 %v545
    %594 = vmatpush.bf16.msra.mxu0 %v544
    %595 = vmatpush.bf16.msra.mxu0 %v543
    %596 = vmatpush.bf16.msra.mxu0 %v542
    %597 = vmatmul.bf16.gmra.mxu0 %v551
    %v598 = vpop.f32.mrf.mxu0
    %v599 = vadd.f32 %v524, %v598
    %v600 = vpop.f32.mrf.mxu0
    %v601 = vadd.f32 %v524, %v600
    %602 = vmatmul.bf16.gmra.mxu0 %v554
    %v603 = vpop.f32.mrf.mxu0
    %v604 = vadd.f32 %v524, %v603
    %v605 = vpop.f32.mrf.mxu0
    %v606 = vadd.f32 %v524, %v605
    %607 = vmatmul.bf16.gmra.mxu0 %v557
    %v608 = vpop.f32.mrf.mxu0
    %v609 = vadd.f32 %v524, %v608
    %v610 = vpop.f32.mrf.mxu0
    %v611 = vadd.f32 %v524, %v610
    %612 = vmatmul.bf16.gmra.mxu0 %v560
    %v613 = vpop.f32.mrf.mxu0
    %v614 = vadd.f32 %v524, %v613
    %v615 = vpop.f32.mrf.mxu0
    %v616 = vadd.f32 %v524, %v615
    %617 = vmatmul.bf16.gmra.mxu0 %v563
    %v618 = vpop.f32.mrf.mxu0
    %v619 = vadd.f32 %v524, %v618
    %v620 = vpop.f32.mrf.mxu0
    %v621 = vadd.f32 %v524, %v620
    %622 = vmatmul.bf16.gmra.mxu0 %v566
    %v623 = vpop.f32.mrf.mxu0
    %v624 = vadd.f32 %v524, %v623
    %v625 = vpop.f32.mrf.mxu0
    %v626 = vadd.f32 %v524, %v625
    %627 = vmatmul.bf16.gmra.mxu0 %v569
    %v628 = vpop.f32.mrf.mxu0
    %v629 = vadd.f32 %v524, %v628
    %v630 = vpop.f32.mrf.mxu0
    %v631 = vadd.f32 %v524, %v630
    %632 = vmatmul.bf16.gmra.mxu0 %v572
    %v633 = vpop.f32.mrf.mxu0
    %v634 = vadd.f32 %v524, %v633
    %v635 = vpop.f32.mrf.mxu0
    %v636 = vadd.f32 %v524, %v635
    %637 = vmatmul.bf16.gmra.mxu0 %v575
    %v638 = vpop.f32.mrf.mxu0
    %v639 = vadd.f32 %v524, %v638
    %v640 = vpop.f32.mrf.mxu0
    %v641 = vadd.f32 %v524, %v640
    %642 = vmatmul.bf16.gmra.mxu0 %v578
    %v643 = vpop.f32.mrf.mxu0
    %v644 = vadd.f32 %v524, %v643
    %v645 = vpop.f32.mrf.mxu0
    %v646 = vadd.f32 %v524, %v645
    %647 = vmatmul.bf16.gmra.mxu0 %v581
    %v648 = vpop.f32.mrf.mxu0
    %v649 = vadd.f32 %v524, %v648
    %v650 = vpop.f32.mrf.mxu0
    %v651 = vadd.f32 %v524, %v650
    %652 = vmatmul.bf16.gmra.mxu0 %v584
    %v653 = vpop.f32.mrf.mxu0
    %v654 = vadd.f32 %v524, %v653
    %v655 = vpop.f32.mrf.mxu0
    %v656 = vadd.f32 %v524, %v655
    %657 = vmatmul.bf16.gmra.mxu0 %v587
    %v658 = vpop.f32.mrf.mxu0
    %v659 = vadd.f32 %v524, %v658
    %v660 = vpop.f32.mrf.mxu0
    %v661 = vadd.f32 %v524, %v660
    %662 = vdwg.mxu0
    %v663 = vmax.f32 %v599, 0.0
    %v664 = vmax.f32 %v601, 0.0
    %v665 = vmax.f32 %v604, 0.0
    %v666 = vmax.f32 %v606, 0.0
    %v667 = vmax.f32 %v609, 0.0
    %v668 = vmax.f32 %v611, 0.0
    %v669 = vmax.f32 %v614, 0.0
    %v670 = vmax.f32 %v616, 0.0
    %v671 = vmax.f32 %v619, 0.0
    %v672 = vmax.f32 %v621, 0.0
    %v673 = vmax.f32 %v624, 0.0
    %v674 = vmax.f32 %v626, 0.0
    %v675 = vmax.f32 %v629, 0.0
    %v676 = vmax.f32 %v631, 0.0
    %v677 = vmax.f32 %v634, 0.0
    %v678 = vmax.f32 %v636, 0.0
    %v679 = vmax.f32 %v639, 0.0
    %v680 = vmax.f32 %v641, 0.0
    %v681 = vmax.f32 %v644, 0.0
    %v682 = vmax.f32 %v646, 0.0
    %v683 = vmax.f32 %v649, 0.0
    %v684 = vmax.f32 %v651, 0.0
    %v685 = vmax.f32 %v654, 0.0
    %v686 = vmax.f32 %v656, 0.0
    %v687 = vmax.f32 %v659, 0.0
    %v688 = vmax.f32 %v661, 0.0
    %v689 = vpack.c.bf16 %v664, %v663
    %v690 = vpack.c.bf16 %v666, %v665
    %v691 = vpack.c.bf16 %v668, %v667
    %v692 = vpack.c.bf16 %v670, %v669
    %v693 = vpack.c.bf16 %v672, %v671
    %v694 = vpack.c.bf16 %v674, %v673
    %v695 = vpack.c.bf16 %v676, %v675
    %v696 = vpack.c.bf16 %v678, %v677
    %v697 = vpack.c.bf16 %v680, %v679
    %v698 = vpack.c.bf16 %v682, %v681
    %v699 = vpack.c.bf16 %v684, %v683
    %v700 = vpack.c.bf16 %v686, %v685
    %v701 = vpack.c.bf16 %v688, %v687
    %v703 = vperm.slane %v86, 0
    %v713 = vunpack.c.l.b16 %v74
    %v714 = vunpack.c.l.b16 %v75
    %v715 = vunpack.c.l.b16 %v76
    %v716 = vunpack.c.l.b16 %v77
    %v717 = vunpack.c.l.b16 %v78
    %v718 = vunpack.c.l.b16 %v79
    %v719 = vunpack.c.l.b16 %v80
    %v720 = vunpack.c.l.b16 %v81
    %v721 = vpack.c.b16 %v714, %v713
    %v722 = vpack.c.b16 %v716, %v715
    %v723 = vpack.c.b16 %v718, %v717
    %v724 = vpack.c.b16 %v720, %v719
    %v730 = vsel %vm370, %v689, 0
    %v733 = vsel %vm370, %v690, 0
    %v736 = vsel %vm370, %v691, 0
    %v739 = vsel %vm370, %v692, 0
    %v742 = vsel %vm370, %v693, 0
    %v745 = vsel %vm370, %v694, 0
    %v748 = vsel %vm370, %v695, 0
    %v751 = vsel %vm370, %v696, 0
    %v754 = vsel %vm370, %v697, 0
    %v757 = vsel %vm370, %v698, 0
    %v760 = vsel %vm370, %v699, 0
    %v763 = vsel %vm370, %v700, 0
    %v766 = vsel %vm370, %v701, 0
    %768 = vmatpush.bf16.msra.mxu0 0
    %769 = vmatpush.bf16.msra.mxu0 0
    %770 = vmatpush.bf16.msra.mxu0 0
    %771 = vmatpush.bf16.msra.mxu0 0
    %772 = vmatpush.bf16.msra.mxu0 %v724
    %773 = vmatpush.bf16.msra.mxu0 %v723
    %774 = vmatpush.bf16.msra.mxu0 %v722
    %775 = vmatpush.bf16.msra.mxu0 %v721
    %776 = vmatmul.bf16.gmra.mxu0 %v730
    %v777 = vpop.f32.mrf.mxu0
    %v778 = vadd.f32 %v703, %v777
    %v779 = vpop.f32.mrf.mxu0
    %v780 = vadd.f32 %v703, %v779
    %781 = vmatmul.bf16.gmra.mxu0 %v733
    %v782 = vpop.f32.mrf.mxu0
    %v783 = vadd.f32 %v703, %v782
    %v784 = vpop.f32.mrf.mxu0
    %v785 = vadd.f32 %v703, %v784
    %786 = vmatmul.bf16.gmra.mxu0 %v736
    %v787 = vpop.f32.mrf.mxu0
    %v788 = vadd.f32 %v703, %v787
    %v789 = vpop.f32.mrf.mxu0
    %v790 = vadd.f32 %v703, %v789
    %791 = vmatmul.bf16.gmra.mxu0 %v739
    %v792 = vpop.f32.mrf.mxu0
    %v793 = vadd.f32 %v703, %v792
    %v794 = vpop.f32.mrf.mxu0
    %v795 = vadd.f32 %v703, %v794
    %796 = vmatmul.bf16.gmra.mxu0 %v742
    %v797 = vpop.f32.mrf.mxu0
    %v798 = vadd.f32 %v703, %v797
    %v799 = vpop.f32.mrf.mxu0
    %v800 = vadd.f32 %v703, %v799
    %801 = vmatmul.bf16.gmra.mxu0 %v745
    %v802 = vpop.f32.mrf.mxu0
    %v803 = vadd.f32 %v703, %v802
    %v804 = vpop.f32.mrf.mxu0
    %v805 = vadd.f32 %v703, %v804
    %806 = vmatmul.bf16.gmra.mxu0 %v748
    %v807 = vpop.f32.mrf.mxu0
    %v808 = vadd.f32 %v703, %v807
    %v809 = vpop.f32.mrf.mxu0
    %v810 = vadd.f32 %v703, %v809
    %811 = vmatmul.bf16.gmra.mxu0 %v751
    %v812 = vpop.f32.mrf.mxu0
    %v813 = vadd.f32 %v703, %v812
    %v814 = vpop.f32.mrf.mxu0
    %v815 = vadd.f32 %v703, %v814
    %816 = vmatmul.bf16.gmra.mxu0 %v754
    %v817 = vpop.f32.mrf.mxu0
    %v818 = vadd.f32 %v703, %v817
    %v819 = vpop.f32.mrf.mxu0
    %v820 = vadd.f32 %v703, %v819
    %821 = vmatmul.bf16.gmra.mxu0 %v757
    %v822 = vpop.f32.mrf.mxu0
    %v823 = vadd.f32 %v703, %v822
    %v824 = vpop.f32.mrf.mxu0
    %v825 = vadd.f32 %v703, %v824
    %826 = vmatmul.bf16.gmra.mxu0 %v760
    %v827 = vpop.f32.mrf.mxu0
    %v828 = vadd.f32 %v703, %v827
    %v829 = vpop.f32.mrf.mxu0
    %v830 = vadd.f32 %v703, %v829
    %831 = vmatmul.bf16.gmra.mxu0 %v763
    %v832 = vpop.f32.mrf.mxu0
    %v833 = vadd.f32 %v703, %v832
    %v834 = vpop.f32.mrf.mxu0
    %v835 = vadd.f32 %v703, %v834
    %836 = vmatmul.bf16.gmra.mxu0 %v766
    %v837 = vpop.f32.mrf.mxu0
    %v838 = vadd.f32 %v703, %v837
    %v839 = vpop.f32.mrf.mxu0
    %v840 = vadd.f32 %v703, %v839
    %841 = vdwg.mxu0
    %v842 = vmax.f32 %v778, 0.0
    %v843 = vmax.f32 %v780, 0.0
    %v844 = vmax.f32 %v783, 0.0
    %v845 = vmax.f32 %v785, 0.0
    %v846 = vmax.f32 %v788, 0.0
    %v847 = vmax.f32 %v790, 0.0
    %v848 = vmax.f32 %v793, 0.0
    %v849 = vmax.f32 %v795, 0.0
    %v850 = vmax.f32 %v798, 0.0
    %v851 = vmax.f32 %v800, 0.0
    %v852 = vmax.f32 %v803, 0.0
    %v853 = vmax.f32 %v805, 0.0
    %v854 = vmax.f32 %v808, 0.0
    %v855 = vmax.f32 %v810, 0.0
    %v856 = vmax.f32 %v813, 0.0
    %v857 = vmax.f32 %v815, 0.0
    %v858 = vmax.f32 %v818, 0.0
    %v859 = vmax.f32 %v820, 0.0
    %v860 = vmax.f32 %v823, 0.0
    %v861 = vmax.f32 %v825, 0.0
    %v862 = vmax.f32 %v828, 0.0
    %v863 = vmax.f32 %v830, 0.0
    %v864 = vmax.f32 %v833, 0.0
    %v865 = vmax.f32 %v835, 0.0
    %v866 = vmax.f32 %v838, 0.0
    %v867 = vmax.f32 %v840, 0.0
    %v868 = vpack.c.bf16 %v843, %v842
    %v869 = vpack.c.bf16 %v845, %v844
    %v870 = vpack.c.bf16 %v847, %v846
    %v871 = vpack.c.bf16 %v849, %v848
    %v872 = vpack.c.bf16 %v851, %v850
    %v873 = vpack.c.bf16 %v853, %v852
    %v874 = vpack.c.bf16 %v855, %v854
    %v875 = vpack.c.bf16 %v857, %v856
    %v876 = vpack.c.bf16 %v859, %v858
    %v877 = vpack.c.bf16 %v861, %v860
    %v878 = vpack.c.bf16 %v863, %v862
    %v879 = vpack.c.bf16 %v865, %v864
    %v880 = vpack.c.bf16 %v867, %v866
    %v882 = vperm.slane %v55, 0
    %v892 = vunpack.c.l.b16 %v47
    %v893 = vunpack.c.l.b16 %v48
    %v894 = vunpack.c.l.b16 %v49
    %v895 = vunpack.c.l.b16 %v50
    %v896 = vunpack.c.l.b16 %v51
    %v897 = vunpack.c.l.b16 %v52
    %v898 = vunpack.c.l.b16 %v53
    %v899 = vunpack.c.l.b16 %v54
    %v900 = vpack.c.b16 %v893, %v892
    %v901 = vpack.c.b16 %v895, %v894
    %v902 = vpack.c.b16 %v897, %v896
    %v903 = vpack.c.b16 %v899, %v898
    %v909 = vsel %vm370, %v868, 0
    %v912 = vsel %vm370, %v869, 0
    %v915 = vsel %vm370, %v870, 0
    %v918 = vsel %vm370, %v871, 0
    %v921 = vsel %vm370, %v872, 0
    %v924 = vsel %vm370, %v873, 0
    %v927 = vsel %vm370, %v874, 0
    %v930 = vsel %vm370, %v875, 0
    %v933 = vsel %vm370, %v876, 0
    %v936 = vsel %vm370, %v877, 0
    %v939 = vsel %vm370, %v878, 0
    %v942 = vsel %vm370, %v879, 0
    %v945 = vsel %vm370, %v880, 0
    %947 = vmatpush.bf16.msra.mxu0 0
    %948 = vmatpush.bf16.msra.mxu0 0
    %949 = vmatpush.bf16.msra.mxu0 0
    %950 = vmatpush.bf16.msra.mxu0 0
    %951 = vmatpush.bf16.msra.mxu0 %v903
    %952 = vmatpush.bf16.msra.mxu0 %v902
    %953 = vmatpush.bf16.msra.mxu0 %v901
    %954 = vmatpush.bf16.msra.mxu0 %v900
    %955 = vmatmul.bf16.gmra.mxu0 %v909
    %v956 = vpop.f32.mrf.mxu0
    %v957 = vadd.f32 %v882, %v956
    %v958 = vpop.f32.mrf.mxu0
    %v959 = vadd.f32 %v882, %v958
    %960 = vmatmul.bf16.gmra.mxu0 %v912
    %v961 = vpop.f32.mrf.mxu0
    %v962 = vadd.f32 %v882, %v961
    %v963 = vpop.f32.mrf.mxu0
    %v964 = vadd.f32 %v882, %v963
    %965 = vmatmul.bf16.gmra.mxu0 %v915
    %v966 = vpop.f32.mrf.mxu0
    %v967 = vadd.f32 %v882, %v966
    %v968 = vpop.f32.mrf.mxu0
    %v969 = vadd.f32 %v882, %v968
    %970 = vmatmul.bf16.gmra.mxu0 %v918
    %v971 = vpop.f32.mrf.mxu0
    %v972 = vadd.f32 %v882, %v971
    %v973 = vpop.f32.mrf.mxu0
    %v974 = vadd.f32 %v882, %v973
    %975 = vmatmul.bf16.gmra.mxu0 %v921
    %v976 = vpop.f32.mrf.mxu0
    %v977 = vadd.f32 %v882, %v976
    %v978 = vpop.f32.mrf.mxu0
    %v979 = vadd.f32 %v882, %v978
    %980 = vmatmul.bf16.gmra.mxu0 %v924
    %v981 = vpop.f32.mrf.mxu0
    %v982 = vadd.f32 %v882, %v981
    %v983 = vpop.f32.mrf.mxu0
    %v984 = vadd.f32 %v882, %v983
    %985 = vmatmul.bf16.gmra.mxu0 %v927
    %v986 = vpop.f32.mrf.mxu0
    %v987 = vadd.f32 %v882, %v986
    %v988 = vpop.f32.mrf.mxu0
    %v989 = vadd.f32 %v882, %v988
    %990 = vmatmul.bf16.gmra.mxu0 %v930
    %v991 = vpop.f32.mrf.mxu0
    %v992 = vadd.f32 %v882, %v991
    %v993 = vpop.f32.mrf.mxu0
    %v994 = vadd.f32 %v882, %v993
    %995 = vmatmul.bf16.gmra.mxu0 %v933
    %v996 = vpop.f32.mrf.mxu0
    %v997 = vadd.f32 %v882, %v996
    %v998 = vpop.f32.mrf.mxu0
    %v999 = vadd.f32 %v882, %v998
    %1000 = vmatmul.bf16.gmra.mxu0 %v936
    %v1001 = vpop.f32.mrf.mxu0
    %v1002 = vadd.f32 %v882, %v1001
    %v1003 = vpop.f32.mrf.mxu0
    %v1004 = vadd.f32 %v882, %v1003
    %1005 = vmatmul.bf16.gmra.mxu0 %v939
    %v1006 = vpop.f32.mrf.mxu0
    %v1007 = vadd.f32 %v882, %v1006
    %v1008 = vpop.f32.mrf.mxu0
    %v1009 = vadd.f32 %v882, %v1008
    %1010 = vmatmul.bf16.gmra.mxu0 %v942
    %v1011 = vpop.f32.mrf.mxu0
    %v1012 = vadd.f32 %v882, %v1011
    %v1013 = vpop.f32.mrf.mxu0
    %v1014 = vadd.f32 %v882, %v1013
    %1015 = vmatmul.bf16.gmra.mxu0 %v945
    %v1016 = vpop.f32.mrf.mxu0
    %v1017 = vadd.f32 %v882, %v1016
    %v1018 = vpop.f32.mrf.mxu0
    %v1019 = vadd.f32 %v882, %v1018
    %1020 = vdwg.mxu0
    %v1021 = vpack.c.bf16 %v957, %v957
    %v1022 = vpack.c.bf16 %v959, %v959
    %v1023 = vpack.c.bf16 %v962, %v962
    %v1024 = vpack.c.bf16 %v964, %v964
    %v1025 = vpack.c.bf16 %v967, %v967
    %v1026 = vpack.c.bf16 %v969, %v969
    %v1027 = vpack.c.bf16 %v972, %v972
    %v1028 = vpack.c.bf16 %v974, %v974
    %v1029 = vpack.c.bf16 %v977, %v977
    %v1030 = vpack.c.bf16 %v979, %v979
    %v1031 = vpack.c.bf16 %v982, %v982
    %v1032 = vpack.c.bf16 %v984, %v984
    %v1033 = vpack.c.bf16 %v987, %v987
    %v1034 = vpack.c.bf16 %v989, %v989
    %v1035 = vpack.c.bf16 %v992, %v992
    %v1036 = vpack.c.bf16 %v994, %v994
    %v1037 = vpack.c.bf16 %v997, %v997
    %v1038 = vpack.c.bf16 %v999, %v999
    %v1039 = vpack.c.bf16 %v1002, %v1002
    %v1040 = vpack.c.bf16 %v1004, %v1004
    %v1041 = vpack.c.bf16 %v1007, %v1007
    %v1042 = vpack.c.bf16 %v1009, %v1009
    %v1043 = vpack.c.bf16 %v1012, %v1012
    %v1044 = vpack.c.bf16 %v1014, %v1014
    %v1045 = vpack.c.bf16 %v1017, %v1017
    %v1046 = vpack.c.bf16 %v1019, %v1019
    %1047 = vst [vmem:[#allocation5] sm:$0xf] %v1021
    %1048 = vst [vmem:[#allocation5 + $0x4] sm:$0xf] %v1022
    %1049 = vst [vmem:[#allocation5 + $0x8] sm:$0xf] %v1023
    %1050 = vst [vmem:[#allocation5 + $0xc] sm:$0xf] %v1024
    %1051 = vst [vmem:[#allocation5 + $0x10] sm:$0xf] %v1025
    %1052 = vst [vmem:[#allocation5 + $0x14] sm:$0xf] %v1026
    %1053 = vst [vmem:[#allocation5 + $0x18] sm:$0xf] %v1027
    %1054 = vst [vmem:[#allocation5 + $0x1c] sm:$0xf] %v1028
    %1055 = vst [vmem:[#allocation5 + $0x20] sm:$0xf] %v1029
    %1056 = vst [vmem:[#allocation5 + $0x24] sm:$0xf] %v1030
    %1057 = vst [vmem:[#allocation5 + $0x28] sm:$0xf] %v1031
    %1058 = vst [vmem:[#allocation5 + $0x2c] sm:$0xf] %v1032
    %1059 = vst [vmem:[#allocation5 + $0x30] sm:$0xf] %v1033
    %1060 = vst [vmem:[#allocation5 + $0x34] sm:$0xf] %v1034
    %1061 = vst [vmem:[#allocation5 + $0x38] sm:$0xf] %v1035
    %1062 = vst [vmem:[#allocation5 + $0x3c] sm:$0xf] %v1036
    %1063 = vst [vmem:[#allocation5 + $0x40] sm:$0xf] %v1037
    %1064 = vst [vmem:[#allocation5 + $0x44] sm:$0xf] %v1038
    %1065 = vst [vmem:[#allocation5 + $0x48] sm:$0xf] %v1039
    %1066 = vst [vmem:[#allocation5 + $0x4c] sm:$0xf] %v1040
    %1067 = vst [vmem:[#allocation5 + $0x50] sm:$0xf] %v1041
    %1068 = vst [vmem:[#allocation5 + $0x54] sm:$0xf] %v1042
    %1069 = vst [vmem:[#allocation5 + $0x58] sm:$0xf] %v1043
    %1070 = vst [vmem:[#allocation5 + $0x5c] sm:$0xf] %v1044
    %1071 = vst [vmem:[#allocation5 + $0x60] sm:$0xf] %v1045
    %1072 = vst [vmem:[#allocation5 + $0x64] sm:$0xf] %v1046
    // Predicated region
    $region34: #{tpu_custom_call.1} parent=1 // pred_check
      _
    $region35: #{tpu_custom_call.1} parent=1 // pred_check_branch
      %1074 = sbr.rel (0) target = $region37
    $region36: #{tpu_custom_call.1} parent=1 // pred_region
      %1076 = vsyncadd [#allocation4], 0
      %s1077 = sshll.u32 [#allocation5], 4
      %s1078 = int_to_ptr.vmem [resolvable:$true] %s1077
      %s1079 = sshll.u32 %s7, 4
      %s1080 = int_to_ptr.hbm [resolvable:$true] %s1079
      %1085 = dma.vmem_to_hbm [thread:$0]  %s1078, 1664, %s1080, [#allocation4], 64, 64, 4
    $region37: #{tpu_custom_call.1} parent=1 // pred_fallthru
      _
    // Predicated region
    $region38: #{tpu_custom_call.1} parent=1 // pred_check
      _
    $region39: #{tpu_custom_call.1} parent=1 // pred_check_branch
      %1087 = sbr.rel (0) target = $region41
    $region40: #{tpu_custom_call.1} parent=1 // pred_region
      %1089 = dma.done [#allocation4], 1664
    $region41: #{tpu_custom_call.1} parent=1 // pred_fallthru
      _
    %1090 = vsyncpa [#allocation3], 1
    %1091 = vsyncpa [#allocation4], 1

</llo_original>
